<compile_context>
chip_gen: v5e
topology: v5e:2x2
jax: 0.10.0
libtpu: 0.0.40
codegen_flags: <defaults>
</compile_context>

<pallas_src>
import jax
import jax.numpy as jnp
from jax import lax
from jax.experimental import pallas as pl
from jax.experimental.pallas import tpu as pltpu


def _lstm_classifier_kernel(x_ref, w0_ref, b0_ref, w1_ref, b1_ref,
                            wout_ref, bout_ref, scores_ref):
    H = w1_ref.shape[0]            # hidden_dim (w1 is (H, 4H))
    x0 = x_ref[0]                  # (B, In) -- only timestep 0 reaches the head

    def lstm_step_t0(inp, w, b):
        # PyTorch gate layout along the 4H lane axis: [i | f | g | o].
        # h_prev = c_prev = 0 => recurrent matmul and f*c_prev terms vanish.
        gates = jnp.dot(inp, w, preferred_element_type=jnp.float32) + b
        # Whole-vreg activations (2 EUP pushes), then slice the lanes we need.
        sig = jax.nn.sigmoid(gates)
        th = jnp.tanh(gates)
        i = sig[:, 0:H]
        g = th[:, 2 * H:3 * H]
        o = sig[:, 3 * H:4 * H]
        c = i * g
        return o * jnp.tanh(c)

    h0 = lstm_step_t0(x0, w0_ref[...], b0_ref[...])   # layer 0
    h1 = lstm_step_t0(h0, w1_ref[...], b1_ref[...])   # layer 1

    # class_scores = softmax(Linear(h1), dim=1)
    logits = (jnp.dot(h1, wout_ref[...], preferred_element_type=jnp.float32)
              + bout_ref[...])
    m = jnp.max(logits, axis=1, keepdims=True)
    e = jnp.exp(logits - m)
    scores_ref[...] = e / jnp.sum(e, axis=1, keepdims=True)


def lstm_classifier_forward(x, params):
    """x: (T, B, input_dim) float32, seq-major (nn.LSTM batch_first=False).
    Returns (B, output_dim) class scores."""
    T, B, In = x.shape
    H = params["w_hh0"].shape[1]
    O = params["w_out"].shape[0]

    # Pre-transpose so the kernel does (B, K) @ (K, 4H) matmuls and fold
    # bias_ih + bias_hh into one (1, 4H) row. The recurrent weights w_hh* are
    # not needed: only timestep 0 (zero hidden state) contributes to the
    # output of this module.
    w0 = params["w_ih0"].T                           # (In, 4H)
    b0 = (params["b_ih0"] + params["b_hh0"])[None]   # (1, 4H)
    w1 = params["w_ih1"].T                           # (H, 4H)
    b1 = (params["b_ih1"] + params["b_hh1"])[None]   # (1, 4H)
    w_out = params["w_out"].T                        # (H, O)
    b_out = params["b_out"][None]                    # (1, O)

    vmem = pl.BlockSpec(memory_space=pltpu.MemorySpace.VMEM)
    return pl.pallas_call(
        _lstm_classifier_kernel,
        out_shape=jax.ShapeDtypeStruct((B, O), jnp.float32),
        in_specs=[vmem] * 7,          # whole arrays resident in VMEM (tiny)
        out_specs=vmem,
    )(x, w0, b0, w1, b1, w_out, b_out)


# ---------------- pure-JAX reference (full T-step recurrence) ----------------
def _reference_forward(x, p):
    T, B, In = x.shape
    H = p["w_hh0"].shape[1]

    def cell(inp, h, c, w_ih, w_hh, b_ih, b_hh):
        gates = inp @ w_ih.T + h @ w_hh.T + b_ih + b_hh
        i, f, g, o = jnp.split(gates, 4, axis=1)
        c_new = jax.nn.sigmoid(f) * c + jax.nn.sigmoid(i) * jnp.tanh(g)
        h_new = jax.nn.sigmoid(o) * jnp.tanh(c_new)
        return h_new, c_new

    def step(carry, x_t):
        h0, c0, h1, c1 = carry
        h0, c0 = cell(x_t, h0, c0, p["w_ih0"], p["w_hh0"], p["b_ih0"], p["b_hh0"])
        h1, c1 = cell(h0, h1, c1, p["w_ih1"], p["w_hh1"], p["b_ih1"], p["b_hh1"])
        return (h0, c0, h1, c1), h1

    z = jnp.zeros((B, H), jnp.float32)
    _, outs = lax.scan(step, (z, z, z, z), x)
    logits = outs[0] @ p["w_out"].T + p["b_out"]   # rnn_output[0] -> head
    return jax.nn.softmax(logits, axis=1)


def _init_params(key, input_dim, hidden_dim, output_dim):
    k = 1.0 / jnp.sqrt(hidden_dim)
    keys = jax.random.split(key, 10)
    u = lambda kk, shape: jax.random.uniform(kk, shape, jnp.float32, -k, k)
    return {
        "w_ih0": u(keys[0], (4 * hidden_dim, input_dim)),
        "w_hh0": u(keys[1], (4 * hidden_dim, hidden_dim)),
        "b_ih0": u(keys[2], (4 * hidden_dim,)),
        "b_hh0": u(keys[3], (4 * hidden_dim,)),
        "w_ih1": u(keys[4], (4 * hidden_dim, hidden_dim)),
        "w_hh1": u(keys[5], (4 * hidden_dim, hidden_dim)),
        "b_ih1": u(keys[6], (4 * hidden_dim,)),
        "b_hh1": u(keys[7], (4 * hidden_dim,)),
        "w_out": u(keys[8], (output_dim, hidden_dim)),
        "b_out": u(keys[9], (output_dim,)),
    }


if __name__ == "__main__":
    SEQ, BATCH, INPUT_DIM, HIDDEN_DIM, OUTPUT_DIM = 8, 8, 16, 32, 8

    key = jax.random.PRNGKey(0)
    kx, kp = jax.random.split(key)
    x = jax.random.normal(kx, (SEQ, BATCH, INPUT_DIM), jnp.float32)
    params = _init_params(kp, INPUT_DIM, HIDDEN_DIM, OUTPUT_DIM)

    scores = jax.block_until_ready(jax.jit(lstm_classifier_forward)(x, params))

    ref = jax.block_until_ready(_reference_forward(x, params))
    assert scores.shape == (BATCH, OUTPUT_DIM)
    assert jnp.allclose(scores, ref, rtol=1e-4, atol=1e-5), "mismatch vs reference"

    print("KERNEL_OK")
</pallas_src>

<mosaic_0001>
module attributes {stable_mosaic.version = 11 : i64} {
  func.func @_lstm_classifier_kernel(%arg0: memref<8x8x16xf32, #tpu.memory_space<vmem>>, %arg1: memref<16x128xf32, #tpu.memory_space<vmem>>, %arg2: memref<1x128xf32, #tpu.memory_space<vmem>>, %arg3: memref<32x128xf32, #tpu.memory_space<vmem>>, %arg4: memref<1x128xf32, #tpu.memory_space<vmem>>, %arg5: memref<32x8xf32, #tpu.memory_space<vmem>>, %arg6: memref<1x8xf32, #tpu.memory_space<vmem>>, %arg7: memref<8x8xf32, #tpu.memory_space<vmem>>) attributes {dimension_semantics = [], scalar_prefetch = 0 : i64, scratch_operands = 0 : i64, tpu.core_type = #tpu.core_type<tc>} {
    %c0 = arith.constant 0 : index
    %c0_0 = arith.constant 0 : index
    %c0_1 = arith.constant 0 : index
    %0 = vector.load %arg0[%c0, %c0_0, %c0_1] : memref<8x8x16xf32, #tpu.memory_space<vmem>>, vector<1x8x16xf32>
    %1 = vector.shape_cast %0 : vector<1x8x16xf32> to vector<8x16xf32>
    %c0_2 = arith.constant 0 : index
    %c0_3 = arith.constant 0 : index
    %2 = vector.load %arg1[%c0_2, %c0_3] : memref<16x128xf32, #tpu.memory_space<vmem>>, vector<16x128xf32>
    %c0_4 = arith.constant 0 : index
    %c0_5 = arith.constant 0 : index
    %3 = vector.load %arg2[%c0_4, %c0_5] : memref<1x128xf32, #tpu.memory_space<vmem>>, vector<1x128xf32>
    %cst = arith.constant dense<0.000000e+00> : vector<8x128xf32>
    %4 = tpu.matmul %1, %2, %cst {dimension_numbers = #tpu.dot_dimension_numbers<[1], [0], [0], [1], [0, 0, 1, 1], [], []>} : vector<8x16xf32>, vector<16x128xf32>, vector<8x128xf32> -> vector<8x128xf32>
    %5 = vector.broadcast %3 : vector<1x128xf32> to vector<8x128xf32>
    %6 = arith.addf %4, %5 : vector<8x128xf32>
    %7 = arith.negf %6 : vector<8x128xf32>
    %8 = math.exp %7 : vector<8x128xf32>
    %cst_6 = arith.constant 1.000000e+00 : f32
    %9 = vector.broadcast %cst_6 : f32 to vector<8x128xf32>
    %10 = arith.addf %9, %8 : vector<8x128xf32>
    %11 = arith.divf %9, %10 : vector<8x128xf32>
    %12 = math.tanh %6 : vector<8x128xf32>
    %13 = vector.extract_strided_slice %11 {offsets = [0, 0], sizes = [8, 32], strides = [1, 1]} : vector<8x128xf32> to vector<8x32xf32>
    %14 = vector.extract_strided_slice %12 {offsets = [0, 64], sizes = [8, 32], strides = [1, 1]} : vector<8x128xf32> to vector<8x32xf32>
    %15 = vector.extract_strided_slice %11 {offsets = [0, 96], sizes = [8, 32], strides = [1, 1]} : vector<8x128xf32> to vector<8x32xf32>
    %16 = arith.mulf %13, %14 : vector<8x32xf32>
    %17 = math.tanh %16 : vector<8x32xf32>
    %18 = arith.mulf %15, %17 : vector<8x32xf32>
    %c0_7 = arith.constant 0 : index
    %c0_8 = arith.constant 0 : index
    %19 = vector.load %arg3[%c0_7, %c0_8] : memref<32x128xf32, #tpu.memory_space<vmem>>, vector<32x128xf32>
    %c0_9 = arith.constant 0 : index
    %c0_10 = arith.constant 0 : index
    %20 = vector.load %arg4[%c0_9, %c0_10] : memref<1x128xf32, #tpu.memory_space<vmem>>, vector<1x128xf32>
    %cst_11 = arith.constant dense<0.000000e+00> : vector<8x128xf32>
    %21 = tpu.matmul %18, %19, %cst_11 {dimension_numbers = #tpu.dot_dimension_numbers<[1], [0], [0], [1], [0, 0, 1, 1], [], []>} : vector<8x32xf32>, vector<32x128xf32>, vector<8x128xf32> -> vector<8x128xf32>
    %22 = vector.broadcast %20 : vector<1x128xf32> to vector<8x128xf32>
    %23 = arith.addf %21, %22 : vector<8x128xf32>
    %24 = arith.negf %23 : vector<8x128xf32>
    %25 = math.exp %24 : vector<8x128xf32>
    %cst_12 = arith.constant 1.000000e+00 : f32
    %26 = vector.broadcast %cst_12 : f32 to vector<8x128xf32>
    %27 = arith.addf %26, %25 : vector<8x128xf32>
    %28 = arith.divf %26, %27 : vector<8x128xf32>
    %29 = math.tanh %23 : vector<8x128xf32>
    %30 = vector.extract_strided_slice %28 {offsets = [0, 0], sizes = [8, 32], strides = [1, 1]} : vector<8x128xf32> to vector<8x32xf32>
    %31 = vector.extract_strided_slice %29 {offsets = [0, 64], sizes = [8, 32], strides = [1, 1]} : vector<8x128xf32> to vector<8x32xf32>
    %32 = vector.extract_strided_slice %28 {offsets = [0, 96], sizes = [8, 32], strides = [1, 1]} : vector<8x128xf32> to vector<8x32xf32>
    %33 = arith.mulf %30, %31 : vector<8x32xf32>
    %34 = math.tanh %33 : vector<8x32xf32>
    %35 = arith.mulf %32, %34 : vector<8x32xf32>
    %c0_13 = arith.constant 0 : index
    %c0_14 = arith.constant 0 : index
    %36 = vector.load %arg5[%c0_13, %c0_14] : memref<32x8xf32, #tpu.memory_space<vmem>>, vector<32x8xf32>
    %cst_15 = arith.constant dense<0.000000e+00> : vector<8x8xf32>
    %37 = tpu.matmul %35, %36, %cst_15 {dimension_numbers = #tpu.dot_dimension_numbers<[1], [0], [0], [1], [0, 0, 1, 1], [], []>} : vector<8x32xf32>, vector<32x8xf32>, vector<8x8xf32> -> vector<8x8xf32>
    %c0_16 = arith.constant 0 : index
    %c0_17 = arith.constant 0 : index
    %38 = vector.load %arg6[%c0_16, %c0_17] : memref<1x8xf32, #tpu.memory_space<vmem>>, vector<1x8xf32>
    %39 = vector.broadcast %38 : vector<1x8xf32> to vector<8x8xf32>
    %40 = arith.addf %37, %39 : vector<8x8xf32>
    %cst_18 = arith.constant dense<0xFF800000> : vector<8xf32>
    %41 = vector.multi_reduction <maximumf>, %40, %cst_18 [1] : vector<8x8xf32> to vector<8xf32>
    %42 = vector.shape_cast %41 : vector<8xf32> to vector<8x1xf32>
    %43 = vector.broadcast %42 : vector<8x1xf32> to vector<8x8xf32>
    %44 = arith.subf %40, %43 : vector<8x8xf32>
    %45 = math.exp %44 : vector<8x8xf32>
    %cst_19 = arith.constant dense<0.000000e+00> : vector<8xf32>
    %46 = vector.multi_reduction <add>, %45, %cst_19 [1] : vector<8x8xf32> to vector<8xf32>
    %47 = vector.shape_cast %46 : vector<8xf32> to vector<8x1xf32>
    %48 = vector.broadcast %47 : vector<8x1xf32> to vector<8x8xf32>
    %49 = arith.divf %45, %48 : vector<8x8xf32>
    %c0_20 = arith.constant 0 : index
    %c0_21 = arith.constant 0 : index
    %50 = vector.load %arg7[%c0_20, %c0_21] : memref<8x8xf32, #tpu.memory_space<vmem>>, vector<8x8xf32>
    tpu.vector_store %arg7[%c0_20, %c0_21], %49 {strides = array<i32>} : memref<8x8xf32, #tpu.memory_space<vmem>>, vector<8x8xf32>,
    return
  }
}

</mosaic_0001>

<llo_original>
// kernel: lstm_classifier_forward.1
$region0: #{lstm_classifier_forward.1}
  #allocation0 [shape = 'u32[]', space=smem, size = 0x4, offset = 0x4, fixed_abs, tag = 'smem constant byte address 0x4 - core index']
  #allocation1 [shape = 'u32[72,128]{1,0:T(1,128)}', space=vmem, size = 0x9000, scoped, tag = 'internal scratch']
  %s0 = inlined_call_operand.hbm [shape: f32[8,8,16], index: 0, kind: input, shape index: {}]
  %s1 = inlined_call_operand.hbm [shape: f32[16,128], index: 1, kind: input, shape index: {}]
  %s2 = inlined_call_operand.vmem [shape: f32[1,128], index: 2, kind: input, shape index: {}]
  %s3 = inlined_call_operand.vmem [shape: f32[32,128], index: 3, kind: input, shape index: {}]
  %s4 = inlined_call_operand.vmem [shape: f32[1,128], index: 4, kind: input, shape index: {}]
  %s5 = inlined_call_operand.vmem [shape: f32[32,8], index: 5, kind: input, shape index: {}]
  %s6 = inlined_call_operand.vmem [shape: f32[1,8], index: 6, kind: input, shape index: {}]
  %s7 = inlined_call_operand.hbm [shape: f32[8,8], index: 7, kind: output, shape index: {}]
  %s8 = sld [smem:[#allocation0]]
  $region46: #{lstm_classifier_forward.1} parent=0
    _
  %s10 = ssub.s32 1, %s8
  %s11 = scalar_select 0, %s10, %s8
  $region1: #{lstm_classifier_forward.1} parent=0
    #allocation2 [shape = 'u8[32768]{0}', space=vmem, size = 0x8000, scoped, tag = 'input window, operand 0, single buffered']
    #allocation3 [shape = 's32[1]{0}', space=sflag, size = 0x4, scoped, tag = 'scoped memory for lstm_classifier_forward.1']
    #allocation4 [shape = 's32[1]{0}', space=sflag, size = 0x4, scoped, tag = 'scoped memory for lstm_classifier_forward.1']
    #allocation5 [shape = 'u8[8192]{0}', space=vmem, size = 0x2000, scoped, tag = 'input window, operand 1, single buffered']
    #allocation6 [shape = 's32[1]{0}', space=sflag, size = 0x4, scoped, tag = 'scoped memory for lstm_classifier_forward.1']
    #allocation7 [shape = 'u8[4096]{0}', space=vmem, size = 0x1000, scoped, tag = 'output window, operand 0, single buffered']
    %12 = vsyncpa [#allocation3], 0
    %13 = vsyncpa [#allocation6], 0
    %14 = vsyncpa [#allocation4], 0
    // Predicated region
    $region2: #{lstm_classifier_forward.1} parent=1 // pred_check
      _
    $region3: #{lstm_classifier_forward.1} parent=1 // pred_check_branch
      %16 = sbr.rel (0) target = $region5
    $region4: #{lstm_classifier_forward.1} parent=1 // pred_region
      %18 = vsyncadd [#allocation3], 0
      %s19 = sshll.u32 %s0, 4
      %s20 = int_to_ptr.hbm [resolvable:$true] %s19
      %s21 = sshll.u32 [#allocation2], 4
      %s22 = int_to_ptr.vmem [resolvable:$true] %s21
      %27 = dma.hbm_to_vmem [thread:$0]  %s20, 1024, %s22, [#allocation3], 128, 128, 8
    $region5: #{lstm_classifier_forward.1} parent=1 // pred_fallthru
      _
    // Predicated region
    $region6: #{lstm_classifier_forward.1} parent=1 // pred_check
      _
    $region7: #{lstm_classifier_forward.1} parent=1 // pred_check_branch
      %29 = sbr.rel (0) target = $region9
    $region8: #{lstm_classifier_forward.1} parent=1 // pred_region
      %31 = vsyncadd [#allocation6], 0
      %s32 = sshll.u32 %s1, 4
      %s33 = int_to_ptr.hbm [resolvable:$true] %s32
      %s34 = sshll.u32 [#allocation5], 4
      %s35 = int_to_ptr.vmem [resolvable:$true] %s34
      %40 = dma.hbm_to_vmem [thread:$0]  %s33, 256, %s35, [#allocation6], 128, 128, 8
    $region9: #{lstm_classifier_forward.1} parent=1 // pred_fallthru
      _
    // Predicated region
    $region10: #{lstm_classifier_forward.1} parent=1 // pred_check
      _
    $region11: #{lstm_classifier_forward.1} parent=1 // pred_check_branch
      %42 = sbr.rel (0) target = $region13
    $region12: #{lstm_classifier_forward.1} parent=1 // pred_region
      _
    $region13: #{lstm_classifier_forward.1} parent=1 // pred_fallthru
      _
    // Predicated region
    $region14: #{lstm_classifier_forward.1} parent=1 // pred_check
      _
    $region15: #{lstm_classifier_forward.1} parent=1 // pred_check_branch
      %44 = sbr.rel (0) target = $region17
    $region16: #{lstm_classifier_forward.1} parent=1 // pred_region
      _
    $region17: #{lstm_classifier_forward.1} parent=1 // pred_fallthru
      _
    // Predicated region
    $region18: #{lstm_classifier_forward.1} parent=1 // pred_check
      _
    $region19: #{lstm_classifier_forward.1} parent=1 // pred_check_branch
      %46 = sbr.rel (0) target = $region21
    $region20: #{lstm_classifier_forward.1} parent=1 // pred_region
      _
    $region21: #{lstm_classifier_forward.1} parent=1 // pred_fallthru
      _
    // Predicated region
    $region22: #{lstm_classifier_forward.1} parent=1 // pred_check
      _
    $region23: #{lstm_classifier_forward.1} parent=1 // pred_check_branch
      %48 = sbr.rel (0) target = $region25
    $region24: #{lstm_classifier_forward.1} parent=1 // pred_region
      _
    $region25: #{lstm_classifier_forward.1} parent=1 // pred_fallthru
      _
    // Predicated region
    $region26: #{lstm_classifier_forward.1} parent=1 // pred_check
      _
    $region27: #{lstm_classifier_forward.1} parent=1 // pred_check_branch
      %50 = sbr.rel (0) target = $region29
    $region28: #{lstm_classifier_forward.1} parent=1 // pred_region
      _
    $region29: #{lstm_classifier_forward.1} parent=1 // pred_fallthru
      _
    // Predicated region
    $region30: #{lstm_classifier_forward.1} parent=1 // pred_check
      _
    $region31: #{lstm_classifier_forward.1} parent=1 // pred_check_branch
      %52 = sbr.rel (0) target = $region33
    $region32: #{lstm_classifier_forward.1} parent=1 // pred_region
      %54 = dma.done [#allocation3], 1024
    $region33: #{lstm_classifier_forward.1} parent=1 // pred_fallthru
      _
    // Predicated region
    $region34: #{lstm_classifier_forward.1} parent=1 // pred_check
      _
    $region35: #{lstm_classifier_forward.1} parent=1 // pred_check_branch
      %56 = sbr.rel (0) target = $region37
    $region36: #{lstm_classifier_forward.1} parent=1 // pred_region
      %58 = dma.done [#allocation6], 256
    $region37: #{lstm_classifier_forward.1} parent=1 // pred_fallthru
      _
    %v59 = vld [vmem:[#allocation2] sm:$0xff]
    %v60 = vld [vmem:[#allocation5] sm:$0xff]
    %v61 = vld [vmem:[#allocation5 + $0x8] sm:$0xff]
    %v62 = vld [vmem:[%s2] sm:$0x1]
    %v64 = vperm.slane %v62, 0
    %vm66 = vcmask 130048
    %v68 = vsel %vm66, %v59, 0
    %70 = vmatpush.msra.mxu0 0.0
    %71 = vmatpush.msra.mxu0 0.0
    %72 = vmatpush.msra.mxu0 0.0
    %73 = vmatpush.msra.mxu0 0.0
    %74 = vmatpush.msra.mxu0 0.0
    %75 = vmatpush.msra.mxu0 0.0
    %76 = vmatpush.msra.mxu0 0.0
    %77 = vmatpush.msra.mxu0 0.0
    %78 = vmatpush.msra.mxu0 0.0
    %79 = vmatpush.msra.mxu0 0.0
    %80 = vmatpush.msra.mxu0 0.0
    %81 = vmatpush.msra.mxu0 0.0
    %82 = vmatpush.msra.mxu0 0.0
    %83 = vmatpush.msra.mxu0 0.0
    %84 = vmatpush.msra.mxu0 %v61
    %85 = vmatpush.msra.mxu0 %v60
    %86 = vmatmul.f32.gmra.mxu0 %v68
    %v87 = vpop.f32.mrf.mxu0
    %v88 = vadd.f32 %v64, %v87
    %89 = vdwg.mxu0
    %v90 = vxor.u32 %v88, 2147483648
    %v91 = vmul.f32 %v90, 1.442695
    %v92 = vpow.pop %v91
    %v93 = vadd.f32 %v92, 1.0
    %v94 = vrcp.pop %v93
    %v95 = vmul.f32 %v93, %v94
    %v96 = vsub.f32 1.0, %v95
    %v97 = vmul.f32 %v94, %v96
    %v98 = vadd.f32 %v94, %v97
    %vm99 = vweird.f32 %v93
    %vm100 = vweird.f32 %v94
    %vm101 = vmor %vm99, %vm100
    %v102 = vsel %vm101, %v94, %v98
    %v103 = vand.u32 2147483647, %v93
    %vm104 = vcmp.eq.f32.partialorder %v103, 8.507059e+37
    %v105 = vand.u32 %v93, 2147483648
    %v106 = vor.u32 1.1754944e-38, %v105
    %v107 = vsel %vm104, %v106, %v102
    %v108 = vmul.f32 1.0, %v107
    %v109 = vtanh.pop %v88
    %111 = vrot.lane.b32.xlu0 %v109, 64
    %v112 = vpop.permute.xlu0 %111
    %v114 = vmul.f32 %v108, %v112
    %v115 = vtanh.pop %v114
    %117 = vrot.lane.b32.xlu0 %v115, 96
    %v118 = vpop.permute.xlu0 %117
    %v120 = vmul.f32 %v108, %v118
    %v121 = vld [vmem:[%s3] sm:$0xff]
    %v122 = vld [vmem:[%s3 + $0x8] sm:$0xff]
    %v123 = vld [vmem:[%s3 + $0x10] sm:$0xff]
    %v124 = vld [vmem:[%s3 + $0x18] sm:$0xff]
    %v125 = vld [vmem:[%s4] sm:$0x1]
    %v127 = vperm.slane %v125, 0
    %130 = vrot.lane.b32.xlu0 %v120, 32
    %v131 = vpop.permute.xlu0 %130
    %vm132 = vcmask 261120
    %v133 = vsel %vm132, %v131, 0
    %135 = vmatpush.msra.mxu0 0.0
    %136 = vmatpush.msra.mxu0 0.0
    %137 = vmatpush.msra.mxu0 0.0
    %138 = vmatpush.msra.mxu0 0.0
    %139 = vmatpush.msra.mxu0 0.0
    %140 = vmatpush.msra.mxu0 0.0
    %141 = vmatpush.msra.mxu0 0.0
    %142 = vmatpush.msra.mxu0 0.0
    %143 = vmatpush.msra.mxu0 0.0
    %144 = vmatpush.msra.mxu0 0.0
    %145 = vmatpush.msra.mxu0 0.0
    %146 = vmatpush.msra.mxu0 0.0
    %147 = vmatpush.msra.mxu0 %v124
    %148 = vmatpush.msra.mxu0 %v123
    %149 = vmatpush.msra.mxu0 %v122
    %150 = vmatpush.msra.mxu0 %v121
    %151 = vmatmul.f32.gmra.mxu0 %v133
    %v152 = vpop.f32.mrf.mxu0
    %v153 = vadd.f32 %v127, %v152
    %154 = vdwg.mxu0
    %v155 = vxor.u32 %v153, 2147483648
    %v156 = vmul.f32 %v155, 1.442695
    %v157 = vpow.pop %v156
    %v158 = vadd.f32 %v157, 1.0
    %v159 = vrcp.pop %v158
    %v160 = vmul.f32 %v158, %v159
    %v161 = vsub.f32 1.0, %v160
    %v162 = vmul.f32 %v159, %v161
    %v163 = vadd.f32 %v159, %v162
    %vm164 = vweird.f32 %v158
    %vm165 = vweird.f32 %v159
    %vm166 = vmor %vm164, %vm165
    %v167 = vsel %vm166, %v159, %v163
    %v168 = vand.u32 2147483647, %v158
    %vm169 = vcmp.eq.f32.partialorder %v168, 8.507059e+37
    %v170 = vand.u32 %v158, 2147483648
    %v171 = vor.u32 1.1754944e-38, %v170
    %v172 = vsel %vm169, %v171, %v167
    %v173 = vmul.f32 1.0, %v172
    %v174 = vtanh.pop %v153
    %176 = vrot.lane.b32.xlu0 %v174, 64
    %v177 = vpop.permute.xlu0 %176
    %v179 = vmul.f32 %v173, %v177
    %v180 = vtanh.pop %v179
    %182 = vrot.lane.b32.xlu0 %v180, 96
    %v183 = vpop.permute.xlu0 %182
    %v185 = vmul.f32 %v173, %v183
    %v186 = vld [vmem:[%s5] sm:$0xff]
    %v187 = vld [vmem:[%s5 + $0x8] sm:$0xff]
    %v188 = vld [vmem:[%s5 + $0x10] sm:$0xff]
    %v189 = vld [vmem:[%s5 + $0x18] sm:$0xff]
    %v190 = vld [vmem:[%s6] sm:$0x1]
    %v192 = vperm.slane %v190, 0
    %195 = vrot.lane.b32.xlu0 %v185, 32
    %v196 = vpop.permute.xlu0 %195
    %v197 = vsel %vm132, %v196, 0
    %199 = vmatpush.msra.mxu0 0.0
    %200 = vmatpush.msra.mxu0 0.0
    %201 = vmatpush.msra.mxu0 0.0
    %202 = vmatpush.msra.mxu0 0.0
    %203 = vmatpush.msra.mxu0 0.0
    %204 = vmatpush.msra.mxu0 0.0
    %205 = vmatpush.msra.mxu0 0.0
    %206 = vmatpush.msra.mxu0 0.0
    %207 = vmatpush.msra.mxu0 0.0
    %208 = vmatpush.msra.mxu0 0.0
    %209 = vmatpush.msra.mxu0 0.0
    %210 = vmatpush.msra.mxu0 0.0
    %211 = vmatpush.msra.mxu0 %v189
    %212 = vmatpush.msra.mxu0 %v188
    %213 = vmatpush.msra.mxu0 %v187
    %214 = vmatpush.msra.mxu0 %v186
    %215 = vmatmul.f32.gmra.mxu0 %v197
    %v216 = vpop.f32.mrf.mxu0
    %v217 = vadd.f32 %v192, %v216
    %218 = vdwg.mxu0
    %vm219 = vcmask 64512
    %v220 = vsel %vm219, %v217, -inf
    %221 = vmax.xlane.f32.xlu0 %v220
    %v222 = vpop.xlane.xlu0 %221
    %v223 = vsub.f32 %v217, %v222
    %v224 = vmul.f32 %v223, 1.442695
    %v225 = vpow.pop %v224
    %v226 = vsel %vm219, %v225, 0.0
    %227 = vadd.xlane.f32.xlu0 %v226
    %v228 = vpop.xlane.xlu0 %227
    %v229 = vrcp.pop %v228
    %v230 = vmul.f32 %v228, %v229
    %v231 = vsub.f32 1.0, %v230
    %v232 = vmul.f32 %v229, %v231
    %v233 = vadd.f32 %v229, %v232
    %vm234 = vweird.f32 %v228
    %vm235 = vweird.f32 %v229
    %vm236 = vmor %vm234, %vm235
    %v237 = vsel %vm236, %v229, %v233
    %v238 = vand.u32 2147483647, %v228
    %vm239 = vcmp.eq.f32.partialorder %v238, 8.507059e+37
    %v240 = vand.u32 %v228, 2147483648
    %v241 = vor.u32 1.1754944e-38, %v240
    %v242 = vsel %vm239, %v241, %v237
    %v243 = vmul.f32 %v225, %v242
    %244 = vst.msk [vmem:[#allocation7] sm:$0xff] %vm219, %v243
    // Predicated region
    $region38: #{lstm_classifier_forward.1} parent=1 // pred_check
      _
    $region39: #{lstm_classifier_forward.1} parent=1 // pred_check_branch
      %246 = sbr.rel (0) target = $region41
    $region40: #{lstm_classifier_forward.1} parent=1 // pred_region
      %248 = vsyncadd [#allocation4], 0
      %s250 = sshll.u32 [#allocation7], 4
      %s251 = int_to_ptr.vmem [resolvable:$true] %s250
      %s252 = sshll.u32 %s7, 4
      %s253 = int_to_ptr.hbm [resolvable:$true] %s252
      %255 = dma.vmem_to_hbm [thread:$0]  %s251, 128, %s253, [#allocation4]
    $region41: #{lstm_classifier_forward.1} parent=1 // pred_fallthru
      _
    // Predicated region
    $region42: #{lstm_classifier_forward.1} parent=1 // pred_check
      _
    $region43: #{lstm_classifier_forward.1} parent=1 // pred_check_branch
      %257 = sbr.rel (0) target = $region45
    $region44: #{lstm_classifier_forward.1} parent=1 // pred_region
      %259 = dma.done [#allocation4], 128
    $region45: #{lstm_classifier_forward.1} parent=1 // pred_fallthru
      _
    %260 = vsyncpa [#allocation3], 1
    %261 = vsyncpa [#allocation6], 1
    %262 = vsyncpa [#allocation4], 1

</llo_original>
